<compile_context>
chip_gen: v7x
topology: tpu7x:2x2x1
jax: 0.10.0
libtpu: 0.0.40
codegen_flags: <defaults>
</compile_context>

<pallas_src>
import functools

import jax
import jax.numpy as jnp
from jax.experimental import pallas as pl
from jax.experimental.pallas import tpu as pltpu


# ---------------------------------------------------------------------------
# Kernel: one fused 3-layer MLP on a packed batch tile.
# ---------------------------------------------------------------------------
def _mlp_kernel(x_ref, w1_ref, b1_ref, w2_ref, b2_ref, w3_ref, b3_ref, o_ref):
    cdt = w1_ref.dtype               # compute dtype (bf16 default); f32 accumulation
    x = x_ref[...].astype(cdt)       # in-kernel cast: x streams from HBM as f32 once
    # layer 1: Linear + ReLU
    h = jnp.dot(x, w1_ref[...], preferred_element_type=jnp.float32)
    h = jnp.maximum(h + b1_ref[...], 0.0).astype(cdt)
    # layer 2: Linear + ReLU
    h = jnp.dot(h, w2_ref[...], preferred_element_type=jnp.float32)
    h = jnp.maximum(h + b2_ref[...], 0.0).astype(cdt)
    # output layer: Linear (no activation)
    out = jnp.dot(h, w3_ref[...], preferred_element_type=jnp.float32) + b3_ref[...]
    o_ref[...] = out.astype(o_ref.dtype)


# ---------------------------------------------------------------------------
# Helpers
# ---------------------------------------------------------------------------
def _round_up(n, m):
    return ((n + m - 1) // m) * m


def _cdiv(a, b):
    return -(-a // b)


def _block_diag(w, n):
    """[i, o] -> [n*i, n*o], block-diagonal with n copies of w (exact: 0/1 eye)."""
    if n == 1:
        return w
    i, o = w.shape
    eye = jnp.eye(n, dtype=w.dtype)
    return (eye[:, None, :, None] * w[None, :, None, :]).reshape(n * i, n * o)


def _choose_pack(in_dim, h1, h2, out_dim, x_bytes, out_bytes):
    """Roofline-aware packing factor.

    Block-diagonal weights inflate MXU FLOPs by `pack`x, so pick the largest
    pack keeping (pack-inflated) MXU time <= HBM streaming time per row.
    """
    kind = ""
    try:
        kind = jax.devices()[0].device_kind.lower()
    except Exception:
        pass
    if "v5 lite" in kind or "v5e" in kind or "v5lite" in kind:
        peak_tf, hbm_gbs = 197.0, 820.0          # v5e
    elif "v6" in kind:
        peak_tf, hbm_gbs = 918.0, 1360.0         # v6e
    elif "v7" in kind:
        peak_tf, hbm_gbs = 996.0, 3200.0         # v7x (per TensorCore)
    else:
        peak_tf, hbm_gbs = 918.0, 1360.0         # conservative default

    flops_per_row = 2.0 * (in_dim * h1 + h1 * h2 + h2 * out_dim)
    bytes_per_row = in_dim * x_bytes + out_dim * out_bytes
    hbm_time = bytes_per_row / (hbm_gbs * 1e9)
    mxu_time_per_pack = flops_per_row / (peak_tf * 1e12)
    bound = hbm_time / max(mxu_time_per_pack, 1e-30)

    pack = 1
    while (pack * 2 <= bound
           and pack * 2 * out_dim <= 128
           and pack * 2 * max(in_dim, h1, h2, out_dim) <= 1024
           and pack * 2 <= 8):                   # never exceed 8x MXU inflation
        pack *= 2
    return pack


_VMEM_BUDGET = 12 * 1024 * 1024   # per-step working-set cap (safe on all gens)
_VMEM_LIMIT = 32 * 1024 * 1024    # scoped VMEM request (<= physical everywhere)


def _compute_tile(B, pack, sub, batch_tile, per_row_vmem):
    """Pick (tile_rows, grid_steps, padded_batch)."""
    min_tile = pack * sub
    Bm = _round_up(B, min_tile)
    cap = max(min_tile, (_VMEM_BUDGET // max(per_row_vmem, 1)) // min_tile * min_tile)
    tile = max(min_tile, min(_round_up(batch_tile, min_tile), Bm, cap))
    steps = _cdiv(Bm, tile)
    # Keep an even number of steps (>= 2) when the batch allows it so the
    # "parallel" grid axis splits evenly across v7x's two TensorCores.
    if Bm >= 2 * min_tile:
        if steps < 2:
            steps = 2
        if steps % 2:
            steps += 1
        tile = min(tile, _round_up(_cdiv(Bm, steps), min_tile))
    Bp = steps * tile
    return tile, steps, Bp


# ---------------------------------------------------------------------------
# Packed-parameter preparation (done ONCE, reused across forward calls)
# ---------------------------------------------------------------------------
def pack_mlp_params(params, *, pack=None, compute_dtype=jnp.bfloat16,
                    out_dtype=jnp.float32):
    """Build block-diagonal weights / tiled biases for the packed layout.

    params: dict w1,b1,w2,b2,w3,b3 with weights stored [in, out]
    (PyTorch x @ W.T + b convention) and biases [1, out].
    Returns an arrays-only pytree (jit-friendly)."""
    w1, b1, w2, b2, w3, b3 = (params[k] for k in ("w1", "b1", "w2", "b2", "w3", "b3"))
    in_dim, h1 = w1.shape
    h2, out_dim = w2.shape[1], w3.shape[1]
    if pack is None:
        pack = _choose_pack(in_dim, h1, h2, out_dim,
                            x_bytes=4, out_bytes=jnp.dtype(out_dtype).itemsize)
    cd = compute_dtype
    return {
        "w1p": _block_diag(w1.astype(cd), pack),
        "b1p": jnp.tile(b1.astype(jnp.float32), (1, pack)),
        "w2p": _block_diag(w2.astype(cd), pack),
        "b2p": jnp.tile(b2.astype(jnp.float32), (1, pack)),
        "w3p": _block_diag(w3.astype(cd), pack),
        "b3p": jnp.tile(b3.astype(jnp.float32), (1, pack)),
    }


# ---------------------------------------------------------------------------
# Forward
# ---------------------------------------------------------------------------
def mlp_tomography_forward(x, packed, *, batch_tile=16384, out_dtype=jnp.float32):
    """x: [B, input_dim] float32.  packed: output of pack_mlp_params.
    `batch_tile` (rows per grid step) is the main tuning knob; sweep
    8192..32768 on real workloads (capped internally by a VMEM budget)."""
    B, in_dim = x.shape
    w1p, b1p, w2p, b2p, w3p, b3p = (packed[k] for k in
                                    ("w1p", "b1p", "w2p", "b2p", "w3p", "b3p"))
    pack = w1p.shape[0] // in_dim
    assert pack * in_dim == w1p.shape[0], "packed params don't match input dim"
    h1 = w1p.shape[1] // pack
    h2 = w2p.shape[1] // pack
    out_dim = w3p.shape[1] // pack
    cd_bytes = jnp.dtype(w1p.dtype).itemsize
    out_bytes = jnp.dtype(out_dtype).itemsize

    # Sublane granularity for the streamed blocks (f32 -> 8 rows, bf16 -> 16).
    sub = max(8, 32 // jnp.dtype(x.dtype).itemsize, 32 // out_bytes)
    # Per-row VMEM estimate: 2x-buffered x/out blocks + live f32 + compute-dtype
    # hidden activations (weights are small and VMEM-resident on top of this).
    per_row_vmem = (2 * in_dim * jnp.dtype(x.dtype).itemsize
                    + 2 * out_dim * out_bytes
                    + (h1 + h2) * (4 + cd_bytes))
    tile, steps, Bp = _compute_tile(B, pack, sub, batch_tile, per_row_vmem)
    tile_p = tile // pack
    Bp_p = Bp // pack

    # Pad only when needed; no dtype cast in the wrapper (cast happens in-kernel).
    x_pad = x if Bp == B else jnp.pad(x, ((0, Bp - B), (0, 0)))
    x_packed = x_pad.reshape(Bp_p, pack * in_dim)   # free reshape of contiguous rows

    # Constant index maps -> weights/biases stay VMEM-resident; only x/out stream.
    const = lambda a: pl.BlockSpec(a.shape, lambda i: (0, 0))

    # Actual MXU work (pack-inflated block-diagonal matmuls) for the scheduler.
    flops = 2 * Bp * pack * (in_dim * h1 + h1 * h2 + h2 * out_dim)
    bytes_accessed = (
        x_packed.size * x_packed.dtype.itemsize
        + Bp * out_dim * out_bytes
        + sum(int(a.size) * a.dtype.itemsize for a in (w1p, b1p, w2p, b2p, w3p, b3p)))

    out_packed = pl.pallas_call(
        _mlp_kernel,
        out_shape=jax.ShapeDtypeStruct((Bp_p, pack * out_dim), out_dtype),
        grid=(steps,),
        in_specs=[
            pl.BlockSpec((tile_p, pack * in_dim), lambda i: (i, 0)),
            const(w1p), const(b1p), const(w2p), const(b2p), const(w3p), const(b3p),
        ],
        out_specs=pl.BlockSpec((tile_p, pack * out_dim), lambda i: (i, 0)),
        compiler_params=pltpu.CompilerParams(
            dimension_semantics=("parallel",),
            vmem_limit_bytes=_VMEM_LIMIT),
        cost_estimate=pl.CostEstimate(flops=int(flops), transcendentals=0,
                                      bytes_accessed=int(bytes_accessed)),
    )(x_packed, w1p, b1p, w2p, b2p, w3p, b3p)

    # Unpack (free reshape of a contiguous array) and drop batch padding.
    return out_packed.reshape(Bp, out_dim)[:B]


# ---------------------------------------------------------------------------
# Parameter init + reference (mirrors the kernel's compute-dtype numerics)
# ---------------------------------------------------------------------------
def init_params(key, input_dim, output_dim, hidden_dims=(32, 32)):
    """Deterministic init mimicking nn.Linear default (uniform +-1/sqrt(fan_in)).
    Weights stored as [in, out] (transposed relative to PyTorch's [out, in])."""
    dims = [input_dim, *hidden_dims, output_dim]
    params = {}
    for li in range(3):
        fan_in, fan_out = dims[li], dims[li + 1]
        key, kw, kb = jax.random.split(key, 3)
        bound = 1.0 / jnp.sqrt(fan_in)
        params[f"w{li + 1}"] = jax.random.uniform(
            kw, (fan_in, fan_out), jnp.float32, -bound, bound)
        params[f"b{li + 1}"] = jax.random.uniform(
            kb, (1, fan_out), jnp.float32, -bound, bound)
    return params


def mlp_reference(x, params, compute_dtype=jnp.bfloat16):
    """Pure-JAX reference with the same compute-dtype casts / f32 accumulation
    as the kernel, so the comparison isolates kernel correctness."""
    cd, f32 = compute_dtype, jnp.float32
    w = lambda k: params[k].astype(cd).astype(f32)
    h = x.astype(cd).astype(f32) @ w("w1") + params["b1"]
    h = jnp.maximum(h, 0.0).astype(cd).astype(f32)
    h = h @ w("w2") + params["b2"]
    h = jnp.maximum(h, 0.0).astype(cd).astype(f32)
    return h @ w("w3") + params["b3"]


if __name__ == "__main__":
    INPUT_DIM, OUTPUT_DIM, BATCH = 16, 8, 100   # BATCH deliberately not a tile multiple

    key = jax.random.PRNGKey(0)
    kx, kp = jax.random.split(key)
    x = jax.random.normal(kx, (BATCH, INPUT_DIM), jnp.float32)
    params = init_params(kp, INPUT_DIM, OUTPUT_DIM, hidden_dims=(32, 32))

    # Pack weights once (device/roofline-aware pack); reuse across all calls.
    packed = pack_mlp_params(params, compute_dtype=jnp.bfloat16)

    fwd = jax.jit(functools.partial(mlp_tomography_forward, batch_tile=16384))
    out = jax.block_until_ready(fwd(x, packed))

    ref = mlp_reference(x, params)
    assert out.shape == (BATCH, OUTPUT_DIM)
    assert out.dtype == jnp.float32
    out_f32 = out.astype(jnp.float32)
    max_err = float(jnp.max(jnp.abs(out_f32 - ref)))
    assert jnp.allclose(out_f32, ref, atol=2e-2, rtol=2e-2), \
        f"mismatch vs reference (max abs err {max_err})"

    print("KERNEL_OK")
</pallas_src>

<mosaic_0001>
module attributes {stable_mosaic.version = 11 : i64} {
  func.func @_mlp_kernel(%arg0: i32, %arg1: memref<8x128xf32, #tpu.memory_space<vmem>>, %arg2: memref<128x256xbf16, #tpu.memory_space<vmem>>, %arg3: memref<1x256xf32, #tpu.memory_space<vmem>>, %arg4: memref<256x256xbf16, #tpu.memory_space<vmem>>, %arg5: memref<1x256xf32, #tpu.memory_space<vmem>>, %arg6: memref<256x64xbf16, #tpu.memory_space<vmem>>, %arg7: memref<1x64xf32, #tpu.memory_space<vmem>>, %arg8: memref<8x64xf32, #tpu.memory_space<vmem>>) attributes {dimension_semantics = [#tpu.dimension_semantics<parallel>], iteration_bounds = array<i64: 2>, scalar_prefetch = 0 : i64, scratch_operands = 0 : i64, tpu.core_type = #tpu.core_type<tc>, window_params = [{transform_indices = @transform_0, window_bounds = array<i64: 8, 128>}, {pipeline_mode = #tpu.pipeline_mode<synchronous>, transform_indices = @transform_1, window_bounds = array<i64: 128, 256>}, {pipeline_mode = #tpu.pipeline_mode<synchronous>, transform_indices = @transform_2, window_bounds = array<i64: 1, 256>}, {pipeline_mode = #tpu.pipeline_mode<synchronous>, transform_indices = @transform_3, window_bounds = array<i64: 256, 256>}, {pipeline_mode = #tpu.pipeline_mode<synchronous>, transform_indices = @transform_4, window_bounds = array<i64: 1, 256>}, {pipeline_mode = #tpu.pipeline_mode<synchronous>, transform_indices = @transform_5, window_bounds = array<i64: 256, 64>}, {pipeline_mode = #tpu.pipeline_mode<synchronous>, transform_indices = @transform_6, window_bounds = array<i64: 1, 64>}, {transform_indices = @transform_7, window_bounds = array<i64: 8, 64>}]} {
    %c0 = arith.constant 0 : index
    %c0_0 = arith.constant 0 : index
    %0 = vector.load %arg1[%c0, %c0_0] : memref<8x128xf32, #tpu.memory_space<vmem>>, vector<8x128xf32>
    %1 = arith.truncf %0 : vector<8x128xf32> to vector<8x128xbf16>
    %c0_1 = arith.constant 0 : index
    %c0_2 = arith.constant 0 : index
    %2 = vector.load %arg2[%c0_1, %c0_2] : memref<128x256xbf16, #tpu.memory_space<vmem>>, vector<128x256xbf16>
    %cst = arith.constant dense<0.000000e+00> : vector<8x256xf32>
    %3 = tpu.matmul %1, %2, %cst {dimension_numbers = #tpu.dot_dimension_numbers<[1], [0], [0], [1], [0, 0, 1, 1], [], []>} : vector<8x128xbf16>, vector<128x256xbf16>, vector<8x256xf32> -> vector<8x256xf32>
    %c0_3 = arith.constant 0 : index
    %c0_4 = arith.constant 0 : index
    %4 = vector.load %arg3[%c0_3, %c0_4] : memref<1x256xf32, #tpu.memory_space<vmem>>, vector<1x256xf32>
    %5 = vector.broadcast %4 : vector<1x256xf32> to vector<8x256xf32>
    %6 = arith.addf %3, %5 : vector<8x256xf32>
    %cst_5 = arith.constant 0.000000e+00 : f32
    %7 = vector.broadcast %cst_5 : f32 to vector<8x256xf32>
    %8 = arith.maximumf %6, %7 : vector<8x256xf32>
    %9 = arith.truncf %8 : vector<8x256xf32> to vector<8x256xbf16>
    %c0_6 = arith.constant 0 : index
    %c0_7 = arith.constant 0 : index
    %10 = vector.load %arg4[%c0_6, %c0_7] : memref<256x256xbf16, #tpu.memory_space<vmem>>, vector<256x256xbf16>
    %cst_8 = arith.constant dense<0.000000e+00> : vector<8x256xf32>
    %11 = tpu.matmul %9, %10, %cst_8 {dimension_numbers = #tpu.dot_dimension_numbers<[1], [0], [0], [1], [0, 0, 1, 1], [], []>} : vector<8x256xbf16>, vector<256x256xbf16>, vector<8x256xf32> -> vector<8x256xf32>
    %c0_9 = arith.constant 0 : index
    %c0_10 = arith.constant 0 : index
    %12 = vector.load %arg5[%c0_9, %c0_10] : memref<1x256xf32, #tpu.memory_space<vmem>>, vector<1x256xf32>
    %13 = vector.broadcast %12 : vector<1x256xf32> to vector<8x256xf32>
    %14 = arith.addf %11, %13 : vector<8x256xf32>
    %cst_11 = arith.constant 0.000000e+00 : f32
    %15 = vector.broadcast %cst_11 : f32 to vector<8x256xf32>
    %16 = arith.maximumf %14, %15 : vector<8x256xf32>
    %17 = arith.truncf %16 : vector<8x256xf32> to vector<8x256xbf16>
    %c0_12 = arith.constant 0 : index
    %c0_13 = arith.constant 0 : index
    %18 = vector.load %arg6[%c0_12, %c0_13] : memref<256x64xbf16, #tpu.memory_space<vmem>>, vector<256x64xbf16>
    %cst_14 = arith.constant dense<0.000000e+00> : vector<8x64xf32>
    %19 = tpu.matmul %17, %18, %cst_14 {dimension_numbers = #tpu.dot_dimension_numbers<[1], [0], [0], [1], [0, 0, 1, 1], [], []>} : vector<8x256xbf16>, vector<256x64xbf16>, vector<8x64xf32> -> vector<8x64xf32>
    %c0_15 = arith.constant 0 : index
    %c0_16 = arith.constant 0 : index
    %20 = vector.load %arg7[%c0_15, %c0_16] : memref<1x64xf32, #tpu.memory_space<vmem>>, vector<1x64xf32>
    %21 = vector.broadcast %20 : vector<1x64xf32> to vector<8x64xf32>
    %22 = arith.addf %19, %21 : vector<8x64xf32>
    %c0_17 = arith.constant 0 : index
    %c0_18 = arith.constant 0 : index
    %23 = vector.load %arg8[%c0_17, %c0_18] : memref<8x64xf32, #tpu.memory_space<vmem>>, vector<8x64xf32>
    tpu.vector_store %arg8[%c0_17, %c0_18], %22 {strides = array<i32>} : memref<8x64xf32, #tpu.memory_space<vmem>>, vector<8x64xf32>,
    return
  }
  func.func @transform_0(%arg0: i32) -> (i32, i32) {
    %c0_i32 = arith.constant 0 : i32
    %c0_i32_0 = arith.constant 0 : i32
    return %arg0, %c0_i32 : i32, i32
  }
  func.func @transform_1(%arg0: i32) -> (i32, i32) {
    %c0_i32 = arith.constant 0 : i32
    %c0_i32_0 = arith.constant 0 : i32
    %c0_i32_1 = arith.constant 0 : i32
    return %c0_i32, %c0_i32_0 : i32, i32
  }
  func.func @transform_2(%arg0: i32) -> (i32, i32) {
    %c0_i32 = arith.constant 0 : i32
    %c0_i32_0 = arith.constant 0 : i32
    %c0_i32_1 = arith.constant 0 : i32
    return %c0_i32, %c0_i32_0 : i32, i32
  }
  func.func @transform_3(%arg0: i32) -> (i32, i32) {
    %c0_i32 = arith.constant 0 : i32
    %c0_i32_0 = arith.constant 0 : i32
    %c0_i32_1 = arith.constant 0 : i32
    return %c0_i32, %c0_i32_0 : i32, i32
  }
  func.func @transform_4(%arg0: i32) -> (i32, i32) {
    %c0_i32 = arith.constant 0 : i32
    %c0_i32_0 = arith.constant 0 : i32
    %c0_i32_1 = arith.constant 0 : i32
    return %c0_i32, %c0_i32_0 : i32, i32
  }
  func.func @transform_5(%arg0: i32) -> (i32, i32) {
    %c0_i32 = arith.constant 0 : i32
    %c0_i32_0 = arith.constant 0 : i32
    %c0_i32_1 = arith.constant 0 : i32
    return %c0_i32, %c0_i32_0 : i32, i32
  }
  func.func @transform_6(%arg0: i32) -> (i32, i32) {
    %c0_i32 = arith.constant 0 : i32
    %c0_i32_0 = arith.constant 0 : i32
    %c0_i32_1 = arith.constant 0 : i32
    return %c0_i32, %c0_i32_0 : i32, i32
  }
  func.func @transform_7(%arg0: i32) -> (i32, i32) {
    %c0_i32 = arith.constant 0 : i32
    %c0_i32_0 = arith.constant 0 : i32
    return %arg0, %c0_i32 : i32, i32
  }
}

</mosaic_0001>

<llo_original>
// kernel: mlp_tomography_forward.1
$region0: #{mlp_tomography_forward.1}
  #allocation0 [shape = 'u32[]', space=smem, size = 0x4, offset = 0x4, fixed_abs, tag = 'smem constant byte address 0x4 - core index']
  #allocation1 [shape = 'u32[144,128]{1,0:T(1,128)}', space=vmem, size = 0x12000, scoped, tag = 'internal scratch']
  %s0 = inlined_call_operand.vmem [shape: f32[16,128], index: 0, kind: input, shape index: {}]
  %s1 = inlined_call_operand.vmem [shape: bf16[128,256], index: 1, kind: input, shape index: {}]
  %s2 = inlined_call_operand.vmem [shape: f32[1,256], index: 2, kind: input, shape index: {}]
  %s3 = inlined_call_operand.vmem [shape: bf16[256,256], index: 3, kind: input, shape index: {}]
  %s4 = inlined_call_operand.vmem [shape: f32[1,256], index: 4, kind: input, shape index: {}]
  %s5 = inlined_call_operand.vmem [shape: bf16[256,64], index: 5, kind: input, shape index: {}]
  %s6 = inlined_call_operand.vmem [shape: f32[1,64], index: 6, kind: input, shape index: {}]
  %s7 = inlined_call_operand.vmem [shape: f32[16,64], index: 7, kind: output, shape index: {}]
  %s8 = sld [smem:[#allocation0]]
  $region61: #{mlp_tomography_forward.1} parent=0
    _
  %s10 = ssub.s32 1, %s8
  %s11 = scalar_select 0, %s10, %s8
  loop: start=0, step=1, limit=4
  $region2: #{mlp_tomography_forward.1} parent=0 // loop_pre_header
    _
  $region3: #{mlp_tomography_forward.1} parent=0 // loop_header
    %s13 = sphi 0, %s17
    %p14 = scmp.ge.s32.totalorder %s13, 4
    %s23 = sphi 0, %s25
    %s26 = sphi 0, %s23
    %s27 = sphi 0, %s26
    %s43 = sphi 0, %s27
    %s47 = sphi 0, %s47
    %s49 = sphi 0, %s47
    %s50 = sphi 0, %s49
    %s64 = sphi 0, %s50
    %s68 = sphi 0, %s68
    %s70 = sphi 0, %s68
    %s71 = sphi 0, %s70
    %s85 = sphi 0, %s71
    %s89 = sphi 0, %s89
    %s91 = sphi 0, %s89
    %s92 = sphi 0, %s91
    %s106 = sphi 0, %s92
    %s110 = sphi 0, %s110
    %s112 = sphi 0, %s110
    %s113 = sphi 0, %s112
    %s127 = sphi 0, %s113
    %s131 = sphi 0, %s131
    %s133 = sphi 0, %s131
    %s134 = sphi 0, %s133
    %s148 = sphi 0, %s134
    %s152 = sphi 0, %s152
    %s154 = sphi 0, %s152
    %s155 = sphi 0, %s154
    %s169 = sphi 0, %s155
    %s175 = sphi 0, %s177
    %s178 = sphi 0, %s175
    %s179 = sphi 0, %s178
    %s195 = sphi 0, %s179
  $region4: #{mlp_tomography_forward.1} parent=0 // loop_header_branch
    %16 = sbr.rel (%p14) target = $region8
  $region5: #{mlp_tomography_forward.1} parent=0 // loop_body
    %s18 = ssub.s32 %s13, 1
    %s19 = ssub.s32 %s13, 2
    %s20 = sadd.s32 %s13, 1
    %s21 = ssub.s32 %s13, %s20
    %p22 = scmp.eq.s32.totalorder %s21, 0
    %s24 = sadd.s32 %s23, 1
    %s25 = scalar_select %p22, %s23, %s24
    %p28 = pneg %p22
    %p29 = scmp.eq.s32.totalorder %s13, 1
    %p30 = por %p28, %p29
    %p31 = scmp.ne.s32.totalorder %s23, %s26
    %p32 = scmp.eq.s32.totalorder %s13, 0
    %p33 = por %p31, %p32
    %p34 = scmp.ne.s32.totalorder %s23, %s26
    %p35 = scmp.eq.s32.totalorder %s18, 1
    %p36 = por %p34, %p35
    %p37 = scmp.ne.s32.totalorder %s26, %s27
    %p38 = scmp.eq.s32.totalorder %s18, 0
    %p39 = por %p37, %p38
    %p40 = scmp.ne.s32.totalorder %s26, %s27
    %p41 = scmp.eq.s32.totalorder %s19, 1
    %p42 = por %p40, %p41
    %p44 = scmp.ne.s32.totalorder %s27, %s43
    %p45 = scmp.eq.s32.totalorder %s19, 0
    %p46 = por %p44, %p45
    %s48 = sadd.s32 %s47, 1
    %p51 = scmp.eq.s32.totalorder %s13, 1
    %p52 = scmp.ne.s32.totalorder %s47, %s49
    %p53 = scmp.eq.s32.totalorder %s13, 0
    %p54 = por %p52, %p53
    %p55 = scmp.ne.s32.totalorder %s47, %s49
    %p56 = scmp.eq.s32.totalorder %s18, 1
    %p57 = por %p55, %p56
    %p58 = scmp.ne.s32.totalorder %s49, %s50
    %p59 = scmp.eq.s32.totalorder %s18, 0
    %p60 = por %p58, %p59
    %p61 = scmp.ne.s32.totalorder %s49, %s50
    %p62 = scmp.eq.s32.totalorder %s19, 1
    %p63 = por %p61, %p62
    %p65 = scmp.ne.s32.totalorder %s50, %s64
    %p66 = scmp.eq.s32.totalorder %s19, 0
    %p67 = por %p65, %p66
    %s69 = sadd.s32 %s68, 1
    %p72 = scmp.eq.s32.totalorder %s13, 1
    %p73 = scmp.ne.s32.totalorder %s68, %s70
    %p74 = scmp.eq.s32.totalorder %s13, 0
    %p75 = por %p73, %p74
    %p76 = scmp.ne.s32.totalorder %s68, %s70
    %p77 = scmp.eq.s32.totalorder %s18, 1
    %p78 = por %p76, %p77
    %p79 = scmp.ne.s32.totalorder %s70, %s71
    %p80 = scmp.eq.s32.totalorder %s18, 0
    %p81 = por %p79, %p80
    %p82 = scmp.ne.s32.totalorder %s70, %s71
    %p83 = scmp.eq.s32.totalorder %s19, 1
    %p84 = por %p82, %p83
    %p86 = scmp.ne.s32.totalorder %s71, %s85
    %p87 = scmp.eq.s32.totalorder %s19, 0
    %p88 = por %p86, %p87
    %s90 = sadd.s32 %s89, 1
    %p93 = scmp.eq.s32.totalorder %s13, 1
    %p94 = scmp.ne.s32.totalorder %s89, %s91
    %p95 = scmp.eq.s32.totalorder %s13, 0
    %p96 = por %p94, %p95
    %p97 = scmp.ne.s32.totalorder %s89, %s91
    %p98 = scmp.eq.s32.totalorder %s18, 1
    %p99 = por %p97, %p98
    %p100 = scmp.ne.s32.totalorder %s91, %s92
    %p101 = scmp.eq.s32.totalorder %s18, 0
    %p102 = por %p100, %p101
    %p103 = scmp.ne.s32.totalorder %s91, %s92
    %p104 = scmp.eq.s32.totalorder %s19, 1
    %p105 = por %p103, %p104
    %p107 = scmp.ne.s32.totalorder %s92, %s106
    %p108 = scmp.eq.s32.totalorder %s19, 0
    %p109 = por %p107, %p108
    %s111 = sadd.s32 %s110, 1
    %p114 = scmp.eq.s32.totalorder %s13, 1
    %p115 = scmp.ne.s32.totalorder %s110, %s112
    %p116 = scmp.eq.s32.totalorder %s13, 0
    %p117 = por %p115, %p116
    %p118 = scmp.ne.s32.totalorder %s110, %s112
    %p119 = scmp.eq.s32.totalorder %s18, 1
    %p120 = por %p118, %p119
    %p121 = scmp.ne.s32.totalorder %s112, %s113
    %p122 = scmp.eq.s32.totalorder %s18, 0
    %p123 = por %p121, %p122
    %p124 = scmp.ne.s32.totalorder %s112, %s113
    %p125 = scmp.eq.s32.totalorder %s19, 1
    %p126 = por %p124, %p125
    %p128 = scmp.ne.s32.totalorder %s113, %s127
    %p129 = scmp.eq.s32.totalorder %s19, 0
    %p130 = por %p128, %p129
    %s132 = sadd.s32 %s131, 1
    %p135 = scmp.eq.s32.totalorder %s13, 1
    %p136 = scmp.ne.s32.totalorder %s131, %s133
    %p137 = scmp.eq.s32.totalorder %s13, 0
    %p138 = por %p136, %p137
    %p139 = scmp.ne.s32.totalorder %s131, %s133
    %p140 = scmp.eq.s32.totalorder %s18, 1
    %p141 = por %p139, %p140
    %p142 = scmp.ne.s32.totalorder %s133, %s134
    %p143 = scmp.eq.s32.totalorder %s18, 0
    %p144 = por %p142, %p143
    %p145 = scmp.ne.s32.totalorder %s133, %s134
    %p146 = scmp.eq.s32.totalorder %s19, 1
    %p147 = por %p145, %p146
    %p149 = scmp.ne.s32.totalorder %s134, %s148
    %p150 = scmp.eq.s32.totalorder %s19, 0
    %p151 = por %p149, %p150
    %s153 = sadd.s32 %s152, 1
    %p156 = scmp.eq.s32.totalorder %s13, 1
    %p157 = scmp.ne.s32.totalorder %s152, %s154
    %p158 = scmp.eq.s32.totalorder %s13, 0
    %p159 = por %p157, %p158
    %p160 = scmp.ne.s32.totalorder %s152, %s154
    %p161 = scmp.eq.s32.totalorder %s18, 1
    %p162 = por %p160, %p161
    %p163 = scmp.ne.s32.totalorder %s154, %s155
    %p164 = scmp.eq.s32.totalorder %s18, 0
    %p165 = por %p163, %p164
    %p166 = scmp.ne.s32.totalorder %s154, %s155
    %p167 = scmp.eq.s32.totalorder %s19, 1
    %p168 = por %p166, %p167
    %p170 = scmp.ne.s32.totalorder %s155, %s169
    %p171 = scmp.eq.s32.totalorder %s19, 0
    %p172 = por %p170, %p171
    %s173 = ssub.s32 %s13, %s20
    %p174 = scmp.eq.s32.totalorder %s173, 0
    %s176 = sadd.s32 %s175, 1
    %s177 = scalar_select %p174, %s175, %s176
    %p180 = pneg %p174
    %p181 = scmp.eq.s32.totalorder %s13, 1
    %p182 = por %p180, %p181
    %p183 = scmp.ne.s32.totalorder %s175, %s178
    %p184 = scmp.eq.s32.totalorder %s13, 0
    %p185 = por %p183, %p184
    %p186 = scmp.ne.s32.totalorder %s175, %s178
    %p187 = scmp.eq.s32.totalorder %s18, 1
    %p188 = por %p186, %p187
    %p189 = scmp.ne.s32.totalorder %s178, %s179
    %p190 = scmp.eq.s32.totalorder %s18, 0
    %p191 = por %p189, %p190
    %p192 = scmp.ne.s32.totalorder %s178, %s179
    %p193 = scmp.eq.s32.totalorder %s19, 1
    %p194 = por %p192, %p193
    %p196 = scmp.ne.s32.totalorder %s179, %s195
    %p197 = scmp.eq.s32.totalorder %s19, 0
    %p198 = por %p196, %p197
    %p199 = scmp.le.s32.totalorder 1, %s13
    %p200 = scmp.lt.s32.totalorder %s13, 3
    %p201 = pnand %p199, %p200
    %p202 = pneg %p201
    // Predicated region
    $region9: #{mlp_tomography_forward.1} parent=5 // pred_check
      _
    $region10: #{mlp_tomography_forward.1} parent=5 // pred_check_branch
      %204 = sbr.rel (%p201) target = $region12
    $region11: #{mlp_tomography_forward.1} parent=5 // pred_region
      %s205 = ssub.s32 %s13, 1
      // Predicated region
      $region13: #{mlp_tomography_forward.1} parent=11 // pred_check
        %p206 = pneg %p60
      $region14: #{mlp_tomography_forward.1} parent=11 // pred_check_branch
        %208 = sbr.rel (%p206) target = $region16
      $region15: #{mlp_tomography_forward.1} parent=11 // pred_region
        _
      $region16: #{mlp_tomography_forward.1} parent=11 // pred_fallthru
        _
      // Predicated region
      $region17: #{mlp_tomography_forward.1} parent=11 // pred_check
        %p209 = pneg %p81
      $region18: #{mlp_tomography_forward.1} parent=11 // pred_check_branch
        %211 = sbr.rel (%p209) target = $region20
      $region19: #{mlp_tomography_forward.1} parent=11 // pred_region
        _
      $region20: #{mlp_tomography_forward.1} parent=11 // pred_fallthru
        _
      // Predicated region
      $region21: #{mlp_tomography_forward.1} parent=11 // pred_check
        %p212 = pneg %p102
      $region22: #{mlp_tomography_forward.1} parent=11 // pred_check_branch
        %214 = sbr.rel (%p212) target = $region24
      $region23: #{mlp_tomography_forward.1} parent=11 // pred_region
        _
      $region24: #{mlp_tomography_forward.1} parent=11 // pred_fallthru
        _
      // Predicated region
      $region25: #{mlp_tomography_forward.1} parent=11 // pred_check
        %p215 = pneg %p123
      $region26: #{mlp_tomography_forward.1} parent=11 // pred_check_branch
        %217 = sbr.rel (%p215) target = $region28
      $region27: #{mlp_tomography_forward.1} parent=11 // pred_region
        _
      $region28: #{mlp_tomography_forward.1} parent=11 // pred_fallthru
        _
      // Predicated region
      $region29: #{mlp_tomography_forward.1} parent=11 // pred_check
        %p218 = pneg %p144
      $region30: #{mlp_tomography_forward.1} parent=11 // pred_check_branch
        %220 = sbr.rel (%p218) target = $region32
      $region31: #{mlp_tomography_forward.1} parent=11 // pred_region
        _
      $region32: #{mlp_tomography_forward.1} parent=11 // pred_fallthru
        _
      // Predicated region
      $region33: #{mlp_tomography_forward.1} parent=11 // pred_check
        %p221 = pneg %p165
      $region34: #{mlp_tomography_forward.1} parent=11 // pred_check_branch
        %223 = sbr.rel (%p221) target = $region36
      $region35: #{mlp_tomography_forward.1} parent=11 // pred_region
        _
      $region36: #{mlp_tomography_forward.1} parent=11 // pred_fallthru
        _
    $region12: #{mlp_tomography_forward.1} parent=5 // pred_fallthru
      _
    %p224 = scmp.lt.s32.totalorder %s13, 2
    // Predicated region
    $region37: #{mlp_tomography_forward.1} parent=5 // pred_check
      %p225 = pneg %p224
    $region38: #{mlp_tomography_forward.1} parent=5 // pred_check_branch
      %227 = sbr.rel (%p225) target = $region40
    $region39: #{mlp_tomography_forward.1} parent=5 // pred_region
      // Predicated region
      $region41: #{mlp_tomography_forward.1} parent=39 // pred_check
        %p228 = pneg %p33
      $region42: #{mlp_tomography_forward.1} parent=39 // pred_check_branch
        %230 = sbr.rel (%p228) target = $region44
      $region43: #{mlp_tomography_forward.1} parent=39 // pred_region
        %p231 = scmp.lt.s32.totalorder %s13, 1
        %s232 = scalar_select %p231, %s13, 1
        %s233 = smul.addr %s232, 8
        %s234 = scalar_lea.vmem %s0, %s233
      $region44: #{mlp_tomography_forward.1} parent=39 // pred_fallthru
        _
    $region40: #{mlp_tomography_forward.1} parent=5 // pred_fallthru
      _
    %p235 = scmp.le.s32.totalorder 1, %s13
    %p236 = scmp.lt.s32.totalorder %s13, 3
    %p237 = pnand %p235, %p236
    %p238 = pneg %p237
    // Predicated region
    $region45: #{mlp_tomography_forward.1} parent=5 // pred_check
      _
    $region46: #{mlp_tomography_forward.1} parent=5 // pred_check_branch
      %240 = sbr.rel (%p237) target = $region48
    $region47: #{mlp_tomography_forward.1} parent=5 // pred_region
      %s241 = ssub.s32 %s13, 1
      %p242 = scmp.lt.s32.totalorder %s18, 1
      %s243 = scalar_select %p242, %s18, 1
      %s244 = smul.addr %s243, 8
      %s245 = scalar_lea.vmem %s0, %s244
      %p246 = pneg %p39
      %p247 = pneg %p36
      %p248 = pneg %p60
      %p249 = pneg %p57
      %p250 = pneg %p81
      %p251 = pneg %p78
      %p252 = pneg %p102
      %p253 = pneg %p99
      %p254 = pneg %p123
      %p255 = pneg %p120
      %p256 = pneg %p144
      %p257 = pneg %p141
      %p258 = pneg %p165
      %p259 = pneg %p162
      %p260 = pneg %p191
      %p261 = pneg %p188
      %p262 = scmp.lt.s32.totalorder %s18, 1
      %s263 = scalar_select %p262, %s18, 1
      %s264 = smul.addr %s263, 8
      %s265 = scalar_lea.vmem %s7, %s264
      %p266 = scmp.lt.s32.totalorder %s18, 1
      %s267 = scalar_select %p266, %s18, 1
      %s268 = smul.addr %s267, 8
      %s269 = scalar_lea.vmem %s0, %s268
      %p270 = scmp.lt.s32.totalorder %s18, 1
      %s271 = scalar_select %p270, %s18, 1
      %s272 = smul.addr %s271, 8
      %s273 = scalar_lea.vmem %s7, %s272
      %v275 = vld [vmem:[%s269] sm:$0xff]
      %v276 = vpack.c.bf16 %v275, %v275
      %v277 = vld [vmem:[%s1] sm:$0xff]
      %v278 = vld [vmem:[%s1 + $0x8] sm:$0xff]
      %v279 = vld [vmem:[%s1 + $0x10] sm:$0xff]
      %v280 = vld [vmem:[%s1 + $0x18] sm:$0xff]
      %v281 = vld [vmem:[%s1 + $0x20] sm:$0xff]
      %v282 = vld [vmem:[%s1 + $0x28] sm:$0xff]
      %v283 = vld [vmem:[%s1 + $0x30] sm:$0xff]
      %v284 = vld [vmem:[%s1 + $0x38] sm:$0xff]
      %v285 = vld [vmem:[%s1 + $0x40] sm:$0xff]
      %v286 = vld [vmem:[%s1 + $0x48] sm:$0xff]
      %v287 = vld [vmem:[%s1 + $0x50] sm:$0xff]
      %v288 = vld [vmem:[%s1 + $0x58] sm:$0xff]
      %v289 = vld [vmem:[%s1 + $0x60] sm:$0xff]
      %v290 = vld [vmem:[%s1 + $0x68] sm:$0xff]
      %v291 = vld [vmem:[%s1 + $0x70] sm:$0xff]
      %v292 = vld [vmem:[%s1 + $0x78] sm:$0xff]
      %v293 = vld [vmem:[%s2] sm:$0x3]
      %v295 = vlaneseq
      %v296 = vshrl.u32 %v295, 7
      %v297 = vsub.s32 0, %v296
      %v298 = vrot.slane %v293, %v297
      %v299 = vlaneseq
      %v300 = vshrl.u32 %v299, 7
      %v301 = vsub.s32 1, %v300
      %v302 = vrot.slane %v293, %v301
      %v321 = vunpack.c.l.b16 %v277
      %v322 = vunpack.c.h.b16 %v277
      %v323 = vunpack.c.l.b16 %v278
      %v324 = vunpack.c.h.b16 %v278
      %v325 = vunpack.c.l.b16 %v279
      %v326 = vunpack.c.h.b16 %v279
      %v327 = vunpack.c.l.b16 %v280
      %v328 = vunpack.c.h.b16 %v280
      %v329 = vunpack.c.l.b16 %v281
      %v330 = vunpack.c.h.b16 %v281
      %v331 = vunpack.c.l.b16 %v282
      %v332 = vunpack.c.h.b16 %v282
      %v333 = vunpack.c.l.b16 %v283
      %v334 = vunpack.c.h.b16 %v283
      %v335 = vunpack.c.l.b16 %v284
      %v336 = vunpack.c.h.b16 %v284
      %v337 = vunpack.c.l.b16 %v285
      %v338 = vunpack.c.h.b16 %v285
      %v339 = vunpack.c.l.b16 %v286
      %v340 = vunpack.c.h.b16 %v286
      %v341 = vunpack.c.l.b16 %v287
      %v342 = vunpack.c.h.b16 %v287
      %v343 = vunpack.c.l.b16 %v288
      %v344 = vunpack.c.h.b16 %v288
      %v345 = vunpack.c.l.b16 %v289
      %v346 = vunpack.c.h.b16 %v289
      %v347 = vunpack.c.l.b16 %v290
      %v348 = vunpack.c.h.b16 %v290
      %v349 = vunpack.c.l.b16 %v291
      %v350 = vunpack.c.h.b16 %v291
      %v351 = vunpack.c.l.b16 %v292
      %v352 = vunpack.c.h.b16 %v292
      %v353 = vpack.c.b16 %v323, %v321
      %v354 = vpack.c.b16 %v324, %v322
      %v355 = vpack.c.b16 %v327, %v325
      %v356 = vpack.c.b16 %v328, %v326
      %v357 = vpack.c.b16 %v331, %v329
      %v358 = vpack.c.b16 %v332, %v330
      %v359 = vpack.c.b16 %v335, %v333
      %v360 = vpack.c.b16 %v336, %v334
      %v361 = vpack.c.b16 %v339, %v337
      %v362 = vpack.c.b16 %v340, %v338
      %v363 = vpack.c.b16 %v343, %v341
      %v364 = vpack.c.b16 %v344, %v342
      %v365 = vpack.c.b16 %v347, %v345
      %v366 = vpack.c.b16 %v348, %v346
      %v367 = vpack.c.b16 %v351, %v349
      %v368 = vpack.c.b16 %v352, %v350
      %385 = vmatprep.subr.bf16.mxu0 %v354
      %386 = vmatpush1.bf16.msra.mxu0 %v353
      %387 = vmatprep.subr.bf16.mxu0 %v356
      %388 = vmatpush1.bf16.msra.mxu0 %v355
      %389 = vmatprep.subr.bf16.mxu0 %v358
      %390 = vmatpush1.bf16.msra.mxu0 %v357
      %391 = vmatprep.subr.bf16.mxu0 %v360
      %392 = vmatpush1.bf16.msra.mxu0 %v359
      %393 = vmatprep.subr.bf16.mxu0 %v362
      %394 = vmatpush1.bf16.msra.mxu0 %v361
      %395 = vmatprep.subr.bf16.mxu0 %v364
      %396 = vmatpush1.bf16.msra.mxu0 %v363
      %397 = vmatprep.subr.bf16.mxu0 %v366
      %398 = vmatpush1.bf16.msra.mxu0 %v365
      %399 = vmatprep.subr.bf16.mxu0 %v368
      %400 = vmatpush1.bf16.msra.mxu0 %v367
      %401 = vmatprep.subr.bf16.mxu0 0
      %402 = vmatpush1.bf16.msra.mxu0 0
      %403 = vmatprep.subr.bf16.mxu0 0
      %404 = vmatpush1.bf16.msra.mxu0 0
      %405 = vmatprep.subr.bf16.mxu0 0
      %406 = vmatpush1.bf16.msra.mxu0 0
      %407 = vmatprep.subr.bf16.mxu0 0
      %408 = vmatpush1.bf16.msra.mxu0 0
      %409 = vmatprep.subr.bf16.mxu0 0
      %410 = vmatpush1.bf16.msra.mxu0 0
      %411 = vmatprep.subr.bf16.mxu0 0
      %412 = vmatpush1.bf16.msra.mxu0 0
      %413 = vmatprep.subr.bf16.mxu0 0
      %414 = vmatpush1.bf16.msra.mxu0 0
      %415 = vmatprep.subr.bf16.mxu0 0
      %416 = vmatpush1.bf16.msra.mxu0 0
      %417 = vmatprep.mubr.bf16.mxu0 0
      %418 = vmatmul.mubr.bf16.gmra.mrb[0].mxu0 %v276
      %v419 = vpop.f32.mrb[0].mxu0
      %v420 = vadd.f32 %v298, %v419
      %v421 = vpop.f32.mrb[0].mxu0
      %v422 = vadd.f32 %v302, %v421
      %v423 = vpop.f32.mrb[0].mxu0
      %v424 = vpop.f32.mrb[0].mxu0
      %425 = vdwg.mxu0
      %v426 = vmax.f32 %v420, 0.0
      %v427 = vmax.f32 %v422, 0.0
      %v428 = vpack.c.bf16 %v426, %v426
      %v429 = vpack.c.bf16 %v427, %v427
      %v430 = vld [vmem:[%s3] sm:$0xff]
      %v431 = vld [vmem:[%s3 + $0x8] sm:$0xff]
      %v432 = vld [vmem:[%s3 + $0x10] sm:$0xff]
      %v433 = vld [vmem:[%s3 + $0x18] sm:$0xff]
      %v434 = vld [vmem:[%s3 + $0x20] sm:$0xff]
      %v435 = vld [vmem:[%s3 + $0x28] sm:$0xff]
      %v436 = vld [vmem:[%s3 + $0x30] sm:$0xff]
      %v437 = vld [vmem:[%s3 + $0x38] sm:$0xff]
      %v438 = vld [vmem:[%s3 + $0x40] sm:$0xff]
      %v439 = vld [vmem:[%s3 + $0x48] sm:$0xff]
      %v440 = vld [vmem:[%s3 + $0x50] sm:$0xff]
      %v441 = vld [vmem:[%s3 + $0x58] sm:$0xff]
      %v442 = vld [vmem:[%s3 + $0x60] sm:$0xff]
      %v443 = vld [vmem:[%s3 + $0x68] sm:$0xff]
      %v444 = vld [vmem:[%s3 + $0x70] sm:$0xff]
      %v445 = vld [vmem:[%s3 + $0x78] sm:$0xff]
      %v446 = vld [vmem:[%s3 + $0x80] sm:$0xff]
      %v447 = vld [vmem:[%s3 + $0x88] sm:$0xff]
      %v448 = vld [vmem:[%s3 + $0x90] sm:$0xff]
      %v449 = vld [vmem:[%s3 + $0x98] sm:$0xff]
      %v450 = vld [vmem:[%s3 + $0xa0] sm:$0xff]
      %v451 = vld [vmem:[%s3 + $0xa8] sm:$0xff]
      %v452 = vld [vmem:[%s3 + $0xb0] sm:$0xff]
      %v453 = vld [vmem:[%s3 + $0xb8] sm:$0xff]
      %v454 = vld [vmem:[%s3 + $0xc0] sm:$0xff]
      %v455 = vld [vmem:[%s3 + $0xc8] sm:$0xff]
      %v456 = vld [vmem:[%s3 + $0xd0] sm:$0xff]
      %v457 = vld [vmem:[%s3 + $0xd8] sm:$0xff]
      %v458 = vld [vmem:[%s3 + $0xe0] sm:$0xff]
      %v459 = vld [vmem:[%s3 + $0xe8] sm:$0xff]
      %v460 = vld [vmem:[%s3 + $0xf0] sm:$0xff]
      %v461 = vld [vmem:[%s3 + $0xf8] sm:$0xff]
      %v462 = vld [vmem:[%s4] sm:$0x3]
      %v464 = vlaneseq
      %v465 = vshrl.u32 %v464, 7
      %v466 = vsub.s32 0, %v465
      %v467 = vrot.slane %v462, %v466
      %v468 = vlaneseq
      %v469 = vshrl.u32 %v468, 7
      %v470 = vsub.s32 1, %v469
      %v471 = vrot.slane %v462, %v470
      %v506 = vunpack.c.l.b16 %v430
      %v507 = vunpack.c.h.b16 %v430
      %v508 = vunpack.c.l.b16 %v431
      %v509 = vunpack.c.h.b16 %v431
      %v510 = vunpack.c.l.b16 %v432
      %v511 = vunpack.c.h.b16 %v432
      %v512 = vunpack.c.l.b16 %v433
      %v513 = vunpack.c.h.b16 %v433
      %v514 = vunpack.c.l.b16 %v434
      %v515 = vunpack.c.h.b16 %v434
      %v516 = vunpack.c.l.b16 %v435
      %v517 = vunpack.c.h.b16 %v435
      %v518 = vunpack.c.l.b16 %v436
      %v519 = vunpack.c.h.b16 %v436
      %v520 = vunpack.c.l.b16 %v437
      %v521 = vunpack.c.h.b16 %v437
      %v522 = vunpack.c.l.b16 %v438
      %v523 = vunpack.c.h.b16 %v438
      %v524 = vunpack.c.l.b16 %v439
      %v525 = vunpack.c.h.b16 %v439
      %v526 = vunpack.c.l.b16 %v440
      %v527 = vunpack.c.h.b16 %v440
      %v528 = vunpack.c.l.b16 %v441
      %v529 = vunpack.c.h.b16 %v441
      %v530 = vunpack.c.l.b16 %v442
      %v531 = vunpack.c.h.b16 %v442
      %v532 = vunpack.c.l.b16 %v443
      %v533 = vunpack.c.h.b16 %v443
      %v534 = vunpack.c.l.b16 %v444
      %v535 = vunpack.c.h.b16 %v444
      %v536 = vunpack.c.l.b16 %v445
      %v537 = vunpack.c.h.b16 %v445
      %v538 = vunpack.c.l.b16 %v446
      %v539 = vunpack.c.h.b16 %v446
      %v540 = vunpack.c.l.b16 %v447
      %v541 = vunpack.c.h.b16 %v447
      %v542 = vunpack.c.l.b16 %v448
      %v543 = vunpack.c.h.b16 %v448
      %v544 = vunpack.c.l.b16 %v449
      %v545 = vunpack.c.h.b16 %v449
      %v546 = vunpack.c.l.b16 %v450
      %v547 = vunpack.c.h.b16 %v450
      %v548 = vunpack.c.l.b16 %v451
      %v549 = vunpack.c.h.b16 %v451
      %v550 = vunpack.c.l.b16 %v452
      %v551 = vunpack.c.h.b16 %v452
      %v552 = vunpack.c.l.b16 %v453
      %v553 = vunpack.c.h.b16 %v453
      %v554 = vunpack.c.l.b16 %v454
      %v555 = vunpack.c.h.b16 %v454
      %v556 = vunpack.c.l.b16 %v455
      %v557 = vunpack.c.h.b16 %v455
      %v558 = vunpack.c.l.b16 %v456
      %v559 = vunpack.c.h.b16 %v456
      %v560 = vunpack.c.l.b16 %v457
      %v561 = vunpack.c.h.b16 %v457
      %v562 = vunpack.c.l.b16 %v458
      %v563 = vunpack.c.h.b16 %v458
      %v564 = vunpack.c.l.b16 %v459
      %v565 = vunpack.c.h.b16 %v459
      %v566 = vunpack.c.l.b16 %v460
      %v567 = vunpack.c.h.b16 %v460
      %v568 = vunpack.c.l.b16 %v461
      %v569 = vunpack.c.h.b16 %v461
      %v570 = vpack.c.b16 %v508, %v506
      %v571 = vpack.c.b16 %v509, %v507
      %v572 = vpack.c.b16 %v512, %v510
      %v573 = vpack.c.b16 %v513, %v511
      %v574 = vpack.c.b16 %v516, %v514
      %v575 = vpack.c.b16 %v517, %v515
      %v576 = vpack.c.b16 %v520, %v518
      %v577 = vpack.c.b16 %v521, %v519
      %v578 = vpack.c.b16 %v524, %v522
      %v579 = vpack.c.b16 %v525, %v523
      %v580 = vpack.c.b16 %v528, %v526
      %v581 = vpack.c.b16 %v529, %v527
      %v582 = vpack.c.b16 %v532, %v530
      %v583 = vpack.c.b16 %v533, %v531
      %v584 = vpack.c.b16 %v536, %v534
      %v585 = vpack.c.b16 %v537, %v535
      %v586 = vpack.c.b16 %v540, %v538
      %v587 = vpack.c.b16 %v541, %v539
      %v588 = vpack.c.b16 %v544, %v542
      %v589 = vpack.c.b16 %v545, %v543
      %v590 = vpack.c.b16 %v548, %v546
      %v591 = vpack.c.b16 %v549, %v547
      %v592 = vpack.c.b16 %v552, %v550
      %v593 = vpack.c.b16 %v553, %v551
      %v594 = vpack.c.b16 %v556, %v554
      %v595 = vpack.c.b16 %v557, %v555
      %v596 = vpack.c.b16 %v560, %v558
      %v597 = vpack.c.b16 %v561, %v559
      %v598 = vpack.c.b16 %v564, %v562
      %v599 = vpack.c.b16 %v565, %v563
      %v600 = vpack.c.b16 %v568, %v566
      %v601 = vpack.c.b16 %v569, %v567
      %634 = vmatprep.subr.bf16.mxu0 %v571
      %635 = vmatpush1.bf16.msra.mxu0 %v570
      %636 = vmatprep.subr.bf16.mxu0 %v573
      %637 = vmatpush1.bf16.msra.mxu0 %v572
      %638 = vmatprep.subr.bf16.mxu0 %v575
      %639 = vmatpush1.bf16.msra.mxu0 %v574
      %640 = vmatprep.subr.bf16.mxu0 %v577
      %641 = vmatpush1.bf16.msra.mxu0 %v576
      %642 = vmatprep.subr.bf16.mxu0 %v579
      %643 = vmatpush1.bf16.msra.mxu0 %v578
      %644 = vmatprep.subr.bf16.mxu0 %v581
      %645 = vmatpush1.bf16.msra.mxu0 %v580
      %646 = vmatprep.subr.bf16.mxu0 %v583
      %647 = vmatpush1.bf16.msra.mxu0 %v582
      %648 = vmatprep.subr.bf16.mxu0 %v585
      %649 = vmatpush1.bf16.msra.mxu0 %v584
      %650 = vmatprep.subr.bf16.mxu0 %v587
      %651 = vmatpush1.bf16.msra.mxu0 %v586
      %652 = vmatprep.subr.bf16.mxu0 %v589
      %653 = vmatpush1.bf16.msra.mxu0 %v588
      %654 = vmatprep.subr.bf16.mxu0 %v591
      %655 = vmatpush1.bf16.msra.mxu0 %v590
      %656 = vmatprep.subr.bf16.mxu0 %v593
      %657 = vmatpush1.bf16.msra.mxu0 %v592
      %658 = vmatprep.subr.bf16.mxu0 %v595
      %659 = vmatpush1.bf16.msra.mxu0 %v594
      %660 = vmatprep.subr.bf16.mxu0 %v597
      %661 = vmatpush1.bf16.msra.mxu0 %v596
      %662 = vmatprep.subr.bf16.mxu0 %v599
      %663 = vmatpush1.bf16.msra.mxu0 %v598
      %664 = vmatprep.subr.bf16.mxu0 %v601
      %665 = vmatpush1.bf16.msra.mxu0 %v600
      %666 = vmatprep.mubr.bf16.mxu0 %v429
      %667 = vmatmul.mubr.bf16.gmra.mrb[0].mxu0 %v428
      %v668 = vpop.f32.mrb[0].mxu0
      %v669 = vadd.f32 %v467, %v668
      %v670 = vpop.f32.mrb[0].mxu0
      %v671 = vadd.f32 %v471, %v670
      %v672 = vpop.f32.mrb[0].mxu0
      %v673 = vpop.f32.mrb[0].mxu0
      %674 = vdwg.mxu0
      %v675 = vmax.f32 %v669, 0.0
      %v676 = vmax.f32 %v671, 0.0
      %v677 = vpack.c.bf16 %v675, %v675
      %v678 = vpack.c.bf16 %v676, %v676
      %v679 = vld [vmem:[%s5] sm:$0xf]
      %v680 = vld [vmem:[%s5 + $0x4] sm:$0xf]
      %v681 = vld [vmem:[%s5 + $0x8] sm:$0xf]
      %v682 = vld [vmem:[%s5 + $0xc] sm:$0xf]
      %v683 = vld [vmem:[%s5 + $0x10] sm:$0xf]
      %v684 = vld [vmem:[%s5 + $0x14] sm:$0xf]
      %v685 = vld [vmem:[%s5 + $0x18] sm:$0xf]
      %v686 = vld [vmem:[%s5 + $0x1c] sm:$0xf]
      %v687 = vld [vmem:[%s5 + $0x20] sm:$0xf]
      %v688 = vld [vmem:[%s5 + $0x24] sm:$0xf]
      %v689 = vld [vmem:[%s5 + $0x28] sm:$0xf]
      %v690 = vld [vmem:[%s5 + $0x2c] sm:$0xf]
      %v691 = vld [vmem:[%s5 + $0x30] sm:$0xf]
      %v692 = vld [vmem:[%s5 + $0x34] sm:$0xf]
      %v693 = vld [vmem:[%s5 + $0x38] sm:$0xf]
      %v694 = vld [vmem:[%s5 + $0x3c] sm:$0xf]
      %v695 = vld [vmem:[%s5 + $0x40] sm:$0xf]
      %v696 = vld [vmem:[%s5 + $0x44] sm:$0xf]
      %v697 = vld [vmem:[%s5 + $0x48] sm:$0xf]
      %v698 = vld [vmem:[%s5 + $0x4c] sm:$0xf]
      %v699 = vld [vmem:[%s5 + $0x50] sm:$0xf]
      %v700 = vld [vmem:[%s5 + $0x54] sm:$0xf]
      %v701 = vld [vmem:[%s5 + $0x58] sm:$0xf]
      %v702 = vld [vmem:[%s5 + $0x5c] sm:$0xf]
      %v703 = vld [vmem:[%s5 + $0x60] sm:$0xf]
      %v704 = vld [vmem:[%s5 + $0x64] sm:$0xf]
      %v705 = vld [vmem:[%s5 + $0x68] sm:$0xf]
      %v706 = vld [vmem:[%s5 + $0x6c] sm:$0xf]
      %v707 = vld [vmem:[%s5 + $0x70] sm:$0xf]
      %v708 = vld [vmem:[%s5 + $0x74] sm:$0xf]
      %v709 = vld [vmem:[%s5 + $0x78] sm:$0xf]
      %v710 = vld [vmem:[%s5 + $0x7c] sm:$0xf]
      %v711 = vld [vmem:[%s6] sm:$0x1]
      %v713 = vlaneseq
      %v714 = vshrl.u32 %v713, 7
      %v715 = vsub.s32 0, %v714
      %v716 = vrot.slane %v711, %v715
      %v750 = vunpack.c.l.b16 %v679
      %v751 = vunpack.c.l.b16 %v680
      %v752 = vunpack.c.l.b16 %v681
      %v753 = vunpack.c.l.b16 %v682
      %v754 = vunpack.c.l.b16 %v683
      %v755 = vunpack.c.l.b16 %v684
      %v756 = vunpack.c.l.b16 %v685
      %v757 = vunpack.c.l.b16 %v686
      %v758 = vunpack.c.l.b16 %v687
      %v759 = vunpack.c.l.b16 %v688
      %v760 = vunpack.c.l.b16 %v689
      %v761 = vunpack.c.l.b16 %v690
      %v762 = vunpack.c.l.b16 %v691
      %v763 = vunpack.c.l.b16 %v692
      %v764 = vunpack.c.l.b16 %v693
      %v765 = vunpack.c.l.b16 %v694
      %v766 = vunpack.c.l.b16 %v695
      %v767 = vunpack.c.l.b16 %v696
      %v768 = vunpack.c.l.b16 %v697
      %v769 = vunpack.c.l.b16 %v698
      %v770 = vunpack.c.l.b16 %v699
      %v771 = vunpack.c.l.b16 %v700
      %v772 = vunpack.c.l.b16 %v701
      %v773 = vunpack.c.l.b16 %v702
      %v774 = vunpack.c.l.b16 %v703
      %v775 = vunpack.c.l.b16 %v704
      %v776 = vunpack.c.l.b16 %v705
      %v777 = vunpack.c.l.b16 %v706
      %v778 = vunpack.c.l.b16 %v707
      %v779 = vunpack.c.l.b16 %v708
      %v780 = vunpack.c.l.b16 %v709
      %v781 = vunpack.c.l.b16 %v710
      %v782 = vpack.c.b16 %v751, %v750
      %v783 = vpack.c.b16 %v753, %v752
      %v784 = vpack.c.b16 %v755, %v754
      %v785 = vpack.c.b16 %v757, %v756
      %v786 = vpack.c.b16 %v759, %v758
      %v787 = vpack.c.b16 %v761, %v760
      %v788 = vpack.c.b16 %v763, %v762
      %v789 = vpack.c.b16 %v765, %v764
      %v790 = vpack.c.b16 %v767, %v766
      %v791 = vpack.c.b16 %v769, %v768
      %v792 = vpack.c.b16 %v771, %v770
      %v793 = vpack.c.b16 %v773, %v772
      %v794 = vpack.c.b16 %v775, %v774
      %v795 = vpack.c.b16 %v777, %v776
      %v796 = vpack.c.b16 %v779, %v778
      %v797 = vpack.c.b16 %v781, %v780
      %814 = vmatprep.subr.bf16.mxu0 0
      %815 = vmatpush1.bf16.msra.mxu0 %v782
      %816 = vmatprep.subr.bf16.mxu0 0
      %817 = vmatpush1.bf16.msra.mxu0 %v783
      %818 = vmatprep.subr.bf16.mxu0 0
      %819 = vmatpush1.bf16.msra.mxu0 %v784
      %820 = vmatprep.subr.bf16.mxu0 0
      %821 = vmatpush1.bf16.msra.mxu0 %v785
      %822 = vmatprep.subr.bf16.mxu0 0
      %823 = vmatpush1.bf16.msra.mxu0 %v786
      %824 = vmatprep.subr.bf16.mxu0 0
      %825 = vmatpush1.bf16.msra.mxu0 %v787
      %826 = vmatprep.subr.bf16.mxu0 0
      %827 = vmatpush1.bf16.msra.mxu0 %v788
      %828 = vmatprep.subr.bf16.mxu0 0
      %829 = vmatpush1.bf16.msra.mxu0 %v789
      %830 = vmatprep.subr.bf16.mxu0 0
      %831 = vmatpush1.bf16.msra.mxu0 %v790
      %832 = vmatprep.subr.bf16.mxu0 0
      %833 = vmatpush1.bf16.msra.mxu0 %v791
      %834 = vmatprep.subr.bf16.mxu0 0
      %835 = vmatpush1.bf16.msra.mxu0 %v792
      %836 = vmatprep.subr.bf16.mxu0 0
      %837 = vmatpush1.bf16.msra.mxu0 %v793
      %838 = vmatprep.subr.bf16.mxu0 0
      %839 = vmatpush1.bf16.msra.mxu0 %v794
      %840 = vmatprep.subr.bf16.mxu0 0
      %841 = vmatpush1.bf16.msra.mxu0 %v795
      %842 = vmatprep.subr.bf16.mxu0 0
      %843 = vmatpush1.bf16.msra.mxu0 %v796
      %844 = vmatprep.subr.bf16.mxu0 0
      %845 = vmatpush1.bf16.msra.mxu0 %v797
      %846 = vmatprep.mubr.bf16.mxu0 %v678
      %847 = vmatmul.mubr.bf16.gmra.mrb[0].mxu0 %v677
      %v848 = vpop.f32.mrb[0].mxu0
      %v849 = vadd.f32 %v716, %v848
      %v850 = vpop.f32.mrb[0].mxu0
      %v851 = vpop.f32.mrb[0].mxu0
      %v852 = vpop.f32.mrb[0].mxu0
      %853 = vdwg.mxu0
      %vm854 = vcmask 523264
      %855 = vst.msk [vmem:[%s273] sm:$0xff] %vm854, %v849
      %p856 = scmp.lt.s32.totalorder %s18, 1
      %s857 = scalar_select %p856, %s18, 1
      %s858 = smul.addr %s857, 8
      %s859 = scalar_lea.vmem %s7, %s858
      // Predicated region
      $region49: #{mlp_tomography_forward.1} parent=47 // pred_check
        %p860 = pneg %p188
      $region50: #{mlp_tomography_forward.1} parent=47 // pred_check_branch
        %862 = sbr.rel (%p860) target = $region52
      $region51: #{mlp_tomography_forward.1} parent=47 // pred_region
        _
      $region52: #{mlp_tomography_forward.1} parent=47 // pred_fallthru
        _
    $region48: #{mlp_tomography_forward.1} parent=5 // pred_fallthru
      _
    %p863 = scmp.le.s32.totalorder 2, %s13
    // Predicated region
    $region53: #{mlp_tomography_forward.1} parent=5 // pred_check
      %p864 = pneg %p863
    $region54: #{mlp_tomography_forward.1} parent=5 // pred_check_branch
      %866 = sbr.rel (%p864) target = $region56
    $region55: #{mlp_tomography_forward.1} parent=5 // pred_region
      %s867 = ssub.s32 %s13, 2
      // Predicated region
      $region57: #{mlp_tomography_forward.1} parent=55 // pred_check
        %p868 = pneg %p194
      $region58: #{mlp_tomography_forward.1} parent=55 // pred_check_branch
        %870 = sbr.rel (%p868) target = $region60
      $region59: #{mlp_tomography_forward.1} parent=55 // pred_region
        %p871 = scmp.lt.s32.totalorder %s19, 1
        %s872 = scalar_select %p871, %s19, 1
        %s873 = smul.addr %s872, 8
        %s874 = scalar_lea.vmem %s7, %s873
      $region60: #{mlp_tomography_forward.1} parent=55 // pred_fallthru
        _
    $region56: #{mlp_tomography_forward.1} parent=5 // pred_fallthru
      _
  $region6: #{mlp_tomography_forward.1} parent=0 // loop_footer
    %s17 = sadd.s32 1, %s13
  $region7: #{mlp_tomography_forward.1} parent=0 // loop_footer_branch
    %12 = sbr.rel target = $region3
  $region8: #{mlp_tomography_forward.1} parent=0 // loop_exit
    _

</llo_original>
